<compile_context>
chip_gen: v5e
topology: v5e:2x2
jax: 0.10.0
libtpu: 0.0.40
codegen_flags: <defaults>
</compile_context>

<pallas_src>
import functools

import jax
import jax.numpy as jnp
from jax.experimental import pallas as pl
from jax.experimental.pallas import tpu as pltpu


def _cdiv(a, b):
    return -(-a // b)


def _round_up(a, m):
    return _cdiv(a, m) * m


def _tpu_generation():
    """Best-effort (vmem_capacity_bytes, tensorcores_per_chip).

    v7x: 64 MiB VMEM per TC, 2 TCs/chip.  v5e/v6e: 128 MiB VMEM, 1 TC.
    Conservative defaults if the query is unavailable."""
    kind = ""
    try:
        kind = jax.devices()[0].device_kind.lower()
    except Exception:
        pass
    is_v7 = "7" in kind
    vmem = None
    try:
        vmem = int(pltpu.get_tpu_info().vmem_capacity_bytes)
    except Exception:
        vmem = None
    if vmem is None:
        vmem = (64 << 20) if is_v7 else (128 << 20)
    cores = 2 if (is_v7 or vmem <= (64 << 20)) else 1
    return vmem, cores


def _choose_tm(T, C, itemsize, *, vmem_bytes, num_cores):
    """Rows per grid step.  ~4 MiB input/step on v7x, ~8 MiB on v5e/v6e; on
    2-TC chips aim for an even grid with >= 2 steps per TensorCore."""
    row_bytes = max(1, C * itemsize)
    small_vmem = vmem_bytes <= (64 << 20)
    target_bytes = (4 << 20) if small_vmem else (8 << 20)
    tm_cap = 8192 if small_vmem else 16384
    tm = max(16, (min(tm_cap, target_bytes // row_bytes) // 16) * 16)
    tm = min(tm, _round_up(max(T, 1), 16))            # never bigger than needed
    if num_cores > 1 and T > 16 * 2 * num_cores:
        min_steps = 2 * num_cores                     # >= 2 steps per TC
        if _cdiv(T, tm) < min_steps:
            tm = min(tm, _round_up(_cdiv(T, min_steps), 16))
        steps = _cdiv(T, tm)
        if steps % num_cores:                         # balance across the TCs
            tm = min(tm, _round_up(_cdiv(T, _round_up(steps, num_cores)), 16))
    return int(max(16, tm))


def _layernorm_kernel(x_ref, w_ref, b_ref, o_ref, *, rcp_c, eps, mxu_reduce):
    # x_ref: (tm, C) tile; w_ref / b_ref: whole-array resident (1, C) f32.
    x = x_ref[...].astype(jnp.float32)
    # Shift each row by its first element before accumulating: removes the
    # catastrophic cancellation of the naive E[x^2] - mu^2 form when
    # |mean| >> std, while keeping the two reductions independent (one pass).
    shift = x[:, 0:1]
    xs = x - shift
    if mxu_reduce:
        # Row sums on the otherwise-idle MXU instead of XLU lane reductions:
        # at small C on v7x the XLU is the likely binding slot, the MXU is free.
        ones = jnp.ones((xs.shape[-1], 1), dtype=jnp.float32)
        s1 = jnp.dot(xs, ones, preferred_element_type=jnp.float32)
        s2 = jnp.dot(xs * xs, ones, preferred_element_type=jnp.float32)
    else:
        s1 = jnp.sum(xs, axis=-1, keepdims=True)
        s2 = jnp.sum(xs * xs, axis=-1, keepdims=True)
    mu_s = s1 * rcp_c                                   # mean of shifted row
    var = jnp.maximum(s2 * rcp_c - mu_s * mu_s, 0.0)    # unbiased=False
    inv = jax.lax.rsqrt(var + eps)
    # (xs - mu_s) == (x - mu): the shift cancels exactly.
    y = (xs - mu_s) * inv * w_ref[...] + b_ref[...]
    o_ref[...] = y.astype(o_ref.dtype)


def _block_spec(shape, index_map, buffers=None):
    if buffers is not None:
        try:
            return pl.BlockSpec(shape, index_map, pipeline_mode=pl.Buffered(buffers))
        except TypeError:  # older BlockSpec signature — fall back to default depth
            pass
    return pl.BlockSpec(shape, index_map)


def withbias_layernorm(x, weight, bias, *, eps=1e-6, tm=None, mxu_reduce=None):
    """x: (..., C); weight, bias: (C,). Returns same shape/dtype as x."""
    orig_shape = x.shape
    C = orig_shape[-1]
    x2 = x.reshape(-1, C)
    T = x2.shape[0]

    vmem_bytes, num_cores = _tpu_generation()
    if tm is None:
        tm = _choose_tm(T, C, x2.dtype.itemsize,
                        vmem_bytes=vmem_bytes, num_cores=num_cores)
    steps = _cdiv(T, tm)
    grid = (steps,)

    if mxu_reduce is None:
        mxu_reduce = (C % 128 == 0) and C <= 256

    w2 = weight.reshape(1, C).astype(jnp.float32)
    b2 = bias.reshape(1, C).astype(jnp.float32)
    # TODO(synk): on v6e/v7x the final affine could run in bf16 (bf16 VALU) for
    # bf16 inputs to shave f32 temp footprint; kept in f32 here for exactness.

    kernel = functools.partial(_layernorm_kernel, rcp_c=1.0 / C, eps=eps,
                               mxu_reduce=mxu_reduce)

    in_tile = tm * C * x2.dtype.itemsize
    out_tile = tm * C * x.dtype.itemsize
    f32_tile = tm * C * 4
    # If tiles ended up small, deepen the input pipeline rather than shrink more.
    in_buffers = 3 if (in_tile < (2 << 20) and steps >= 3) else None

    # (2-3)x buffered input + 2x output tiles + ~3 f32 working copies + w/b +
    # headroom; capped per generation (<= ~85% physical VMEM, <= 100 MiB).
    need = ((in_buffers or 2) * in_tile + 2 * out_tile + 3 * f32_tile
            + 2 * C * 4 + (2 << 20))
    cap = min(int(vmem_bytes * 0.85), 100 << 20)
    vmem_limit = int(min(cap, max(16 << 20, need)))

    out = pl.pallas_call(
        kernel,
        out_shape=jax.ShapeDtypeStruct((T, C), x.dtype),
        grid_spec=pltpu.PrefetchScalarGridSpec(
            num_scalar_prefetch=0,
            grid=grid,
            in_specs=[
                _block_spec((tm, C), lambda i: (i, 0), buffers=in_buffers),
                pl.BlockSpec(memory_space=pltpu.MemorySpace.VMEM),   # weight (resident)
                pl.BlockSpec(memory_space=pltpu.MemorySpace.VMEM),   # bias (resident)
            ],
            out_specs=pl.BlockSpec((tm, C), lambda i: (i, 0)),
        ),
        compiler_params=pltpu.CompilerParams(
            dimension_semantics=("parallel",),
            vmem_limit_bytes=vmem_limit,
        ),
    )(x2, w2, b2)

    return out.reshape(orig_shape)


def _reference(x, weight, bias, eps=1e-6):
    mu = jnp.mean(x, axis=-1, keepdims=True)
    var = jnp.mean((x - mu) ** 2, axis=-1, keepdims=True)
    return (x - mu) / jnp.sqrt(var + eps) * weight + bias


if __name__ == "__main__":
    key = jax.random.PRNGKey(0)

    # Main case: lane-dense channel dim (C multiple of 128), default affine
    # params (ones / zeros, matching the module's nn.Parameter init).
    B, N, C = 2, 64, 128
    x = jax.random.normal(key, (B, N, C), dtype=jnp.float32)
    weight = jnp.ones((C,), dtype=jnp.float32)
    bias = jnp.zeros((C,), dtype=jnp.float32)

    y = jax.block_until_ready(withbias_layernorm(x, weight, bias))
    assert y.shape == x.shape
    assert jnp.max(jnp.abs(y - _reference(x, weight, bias))) < 1e-5

    # Partial-last-block path (token count not divisible by the tile) with
    # non-trivial weight/bias, plus a mean offset to stress the statistics.
    k1, k2, k3 = jax.random.split(jax.random.PRNGKey(0), 3)
    x2 = jax.random.normal(k1, (4, 25, C), dtype=jnp.float32) + 10.0   # T = 100
    w2 = jax.random.normal(k2, (C,), dtype=jnp.float32)
    b2 = jax.random.normal(k3, (C,), dtype=jnp.float32)
    y2 = jax.block_until_ready(withbias_layernorm(x2, w2, b2))
    assert y2.shape == x2.shape
    assert jnp.max(jnp.abs(y2 - _reference(x2, w2, b2))) < 1e-4

    # Non-128-multiple channel dim: exercises the XLU-sum (non-MXU) reduction.
    k4, k5, k6 = jax.random.split(jax.random.PRNGKey(1), 3)
    x3 = jax.random.normal(k4, (2, 7, 96), dtype=jnp.float32)
    w3 = jax.random.normal(k5, (96,), dtype=jnp.float32)
    b3 = jax.random.normal(k6, (96,), dtype=jnp.float32)
    y3 = jax.block_until_ready(withbias_layernorm(x3, w3, b3))
    assert y3.shape == x3.shape
    assert jnp.max(jnp.abs(y3 - _reference(x3, w3, b3))) < 1e-4

    print("KERNEL_OK")
</pallas_src>

<mosaic_0001>
module attributes {stable_mosaic.version = 11 : i64} {
  func.func @_layernorm_kernel(%arg0: i32, %arg1: memref<128x128xf32, #tpu.memory_space<vmem>>, %arg2: memref<1x128xf32, #tpu.memory_space<vmem>>, %arg3: memref<1x128xf32, #tpu.memory_space<vmem>>, %arg4: memref<128x128xf32, #tpu.memory_space<vmem>>) attributes {dimension_semantics = [#tpu.dimension_semantics<parallel>], iteration_bounds = array<i64: 1>, scalar_prefetch = 0 : i64, scratch_operands = 0 : i64, tpu.core_type = #tpu.core_type<tc>, window_params = [{transform_indices = @transform_0, window_bounds = array<i64: 128, 128>}, {pipeline_mode = #tpu.pipeline_mode<synchronous>, transform_indices = @transform_1, window_bounds = array<i64: 1, 128>}, {pipeline_mode = #tpu.pipeline_mode<synchronous>, transform_indices = @transform_2, window_bounds = array<i64: 1, 128>}, {transform_indices = @transform_3, window_bounds = array<i64: 128, 128>}]} {
    %c0 = arith.constant 0 : index
    %c0_0 = arith.constant 0 : index
    %0 = vector.load %arg1[%c0, %c0_0] : memref<128x128xf32, #tpu.memory_space<vmem>>, vector<128x128xf32>
    %1 = vector.extract_strided_slice %0 {offsets = [0, 0], sizes = [128, 1], strides = [1, 1]} : vector<128x128xf32> to vector<128x1xf32>
    %2 = vector.broadcast %1 : vector<128x1xf32> to vector<128x128xf32>
    %3 = arith.subf %0, %2 : vector<128x128xf32>
    %cst = arith.constant 1.000000e+00 : f32
    %4 = vector.broadcast %cst : f32 to vector<128x1xf32>
    %cst_1 = arith.constant dense<0.000000e+00> : vector<128x1xf32>
    %5 = tpu.matmul %3, %4, %cst_1 {dimension_numbers = #tpu.dot_dimension_numbers<[1], [0], [0], [1], [0, 0, 1, 1], [], []>} : vector<128x128xf32>, vector<128x1xf32>, vector<128x1xf32> -> vector<128x1xf32>
    %6 = arith.mulf %3, %3 : vector<128x128xf32>
    %cst_2 = arith.constant dense<0.000000e+00> : vector<128x1xf32>
    %7 = tpu.matmul %6, %4, %cst_2 {dimension_numbers = #tpu.dot_dimension_numbers<[1], [0], [0], [1], [0, 0, 1, 1], [], []>} : vector<128x128xf32>, vector<128x1xf32>, vector<128x1xf32> -> vector<128x1xf32>
    %cst_3 = arith.constant 7.812500e-03 : f32
    %8 = vector.broadcast %cst_3 : f32 to vector<128x1xf32>
    %9 = arith.mulf %5, %8 : vector<128x1xf32>
    %cst_4 = arith.constant 7.812500e-03 : f32
    %10 = vector.broadcast %cst_4 : f32 to vector<128x1xf32>
    %11 = arith.mulf %7, %10 : vector<128x1xf32>
    %12 = arith.mulf %9, %9 : vector<128x1xf32>
    %13 = arith.subf %11, %12 : vector<128x1xf32>
    %cst_5 = arith.constant 0.000000e+00 : f32
    %14 = vector.broadcast %cst_5 : f32 to vector<128x1xf32>
    %15 = arith.maximumf %13, %14 : vector<128x1xf32>
    %cst_6 = arith.constant 9.99999997E-7 : f32
    %16 = vector.broadcast %cst_6 : f32 to vector<128x1xf32>
    %17 = arith.addf %15, %16 : vector<128x1xf32>
    %18 = math.rsqrt %17 : vector<128x1xf32>
    %19 = vector.broadcast %9 : vector<128x1xf32> to vector<128x128xf32>
    %20 = arith.subf %3, %19 : vector<128x128xf32>
    %21 = vector.broadcast %18 : vector<128x1xf32> to vector<128x128xf32>
    %22 = arith.mulf %20, %21 : vector<128x128xf32>
    %c0_7 = arith.constant 0 : index
    %c0_8 = arith.constant 0 : index
    %23 = vector.load %arg2[%c0_7, %c0_8] : memref<1x128xf32, #tpu.memory_space<vmem>>, vector<1x128xf32>
    %24 = vector.broadcast %23 : vector<1x128xf32> to vector<128x128xf32>
    %25 = arith.mulf %22, %24 : vector<128x128xf32>
    %c0_9 = arith.constant 0 : index
    %c0_10 = arith.constant 0 : index
    %26 = vector.load %arg3[%c0_9, %c0_10] : memref<1x128xf32, #tpu.memory_space<vmem>>, vector<1x128xf32>
    %27 = vector.broadcast %26 : vector<1x128xf32> to vector<128x128xf32>
    %28 = arith.addf %25, %27 : vector<128x128xf32>
    %c0_11 = arith.constant 0 : index
    %c0_12 = arith.constant 0 : index
    %29 = vector.load %arg4[%c0_11, %c0_12] : memref<128x128xf32, #tpu.memory_space<vmem>>, vector<128x128xf32>
    tpu.vector_store %arg4[%c0_11, %c0_12], %28 {strides = array<i32>} : memref<128x128xf32, #tpu.memory_space<vmem>>, vector<128x128xf32>,
    return
  }
  func.func @transform_0(%arg0: i32) -> (i32, i32) {
    %c0_i32 = arith.constant 0 : i32
    %c0_i32_0 = arith.constant 0 : i32
    return %arg0, %c0_i32 : i32, i32
  }
  func.func @transform_1(%arg0: i32) -> (i32, i32) {
    %c0_i32 = arith.constant 0 : i32
    %c0_i32_0 = arith.constant 0 : i32
    %c0_i32_1 = arith.constant 0 : i32
    return %c0_i32, %c0_i32_0 : i32, i32
  }
  func.func @transform_2(%arg0: i32) -> (i32, i32) {
    %c0_i32 = arith.constant 0 : i32
    %c0_i32_0 = arith.constant 0 : i32
    %c0_i32_1 = arith.constant 0 : i32
    return %c0_i32, %c0_i32_0 : i32, i32
  }
  func.func @transform_3(%arg0: i32) -> (i32, i32) {
    %c0_i32 = arith.constant 0 : i32
    %c0_i32_0 = arith.constant 0 : i32
    return %arg0, %c0_i32 : i32, i32
  }
}

</mosaic_0001>

<llo_original>
// kernel: tpu_custom_call.1
$region0: #{tpu_custom_call.1}
  #allocation0 [shape = 'u32[]', space=smem, size = 0x4, offset = 0x4, fixed_abs, tag = 'smem constant byte address 0x4 - core index']
  #allocation1 [shape = 'u32[72,128]{1,0:T(1,128)}', space=vmem, size = 0x9000, scoped, tag = 'internal scratch']
  %s0 = inlined_call_operand.hbm [shape: f32[128,128], index: 0, kind: input, shape index: {}]
  %s1 = inlined_call_operand.hbm [shape: f32[1,128], index: 1, kind: input, shape index: {}]
  %s2 = inlined_call_operand.vmem [shape: f32[1,128], index: 2, kind: input, shape index: {}]
  %s3 = inlined_call_operand.hbm [shape: f32[128,128], index: 3, kind: output, shape index: {}]
  %s4 = sld [smem:[#allocation0]]
  $region30: #{tpu_custom_call.1} parent=0
    _
  %s6 = ssub.s32 1, %s4
  %s7 = scalar_select 0, %s6, %s4
  $region1: #{tpu_custom_call.1} parent=0
    #allocation2 [shape = 'u8[65536]{0}', space=vmem, size = 0x10000, scoped, tag = 'input window, operand 0, single buffered']
    #allocation3 [shape = 's32[1]{0}', space=sflag, size = 0x4, scoped, tag = 'scoped memory for tpu_custom_call.1']
    #allocation4 [shape = 's32[1]{0}', space=sflag, size = 0x4, scoped, tag = 'scoped memory for tpu_custom_call.1']
    #allocation5 [shape = 'u8[512]{0}', space=vmem, size = 0x400, scoped, tag = 'input window, operand 1, single buffered']
    #allocation6 [shape = 's32[1]{0}', space=sflag, size = 0x4, scoped, tag = 'scoped memory for tpu_custom_call.1']
    #allocation7 [shape = 'u8[65536]{0}', space=vmem, size = 0x10000, scoped, tag = 'output window, operand 0, single buffered']
    %8 = vsyncpa [#allocation3], 0
    %9 = vsyncpa [#allocation6], 0
    %10 = vsyncpa [#allocation4], 0
    // Predicated region
    $region2: #{tpu_custom_call.1} parent=1 // pred_check
      _
    $region3: #{tpu_custom_call.1} parent=1 // pred_check_branch
      %12 = sbr.rel (0) target = $region5
    $region4: #{tpu_custom_call.1} parent=1 // pred_region
      %14 = vsyncadd [#allocation3], 0
      %s15 = sshll.u32 %s0, 4
      %s16 = int_to_ptr.hbm [resolvable:$true] %s15
      %s17 = sshll.u32 [#allocation2], 4
      %s18 = int_to_ptr.vmem [resolvable:$true] %s17
      %23 = dma.hbm_to_vmem [thread:$0]  %s16, 2048, %s18, [#allocation3], 128, 128, 8
    $region5: #{tpu_custom_call.1} parent=1 // pred_fallthru
      _
    // Predicated region
    $region6: #{tpu_custom_call.1} parent=1 // pred_check
      _
    $region7: #{tpu_custom_call.1} parent=1 // pred_check_branch
      %25 = sbr.rel (0) target = $region9
    $region8: #{tpu_custom_call.1} parent=1 // pred_region
      %27 = vsyncadd [#allocation6], 0
      %s29 = sshll.u32 %s1, 4
      %s30 = int_to_ptr.hbm [resolvable:$true] %s29
      %s31 = sshll.u32 [#allocation5], 4
      %s32 = int_to_ptr.vmem [resolvable:$true] %s31
      %34 = dma.hbm_to_vmem [thread:$0]  %s30, 16, %s32, [#allocation6]
    $region9: #{tpu_custom_call.1} parent=1 // pred_fallthru
      _
    // Predicated region
    $region10: #{tpu_custom_call.1} parent=1 // pred_check
      _
    $region11: #{tpu_custom_call.1} parent=1 // pred_check_branch
      %36 = sbr.rel (0) target = $region13
    $region12: #{tpu_custom_call.1} parent=1 // pred_region
      _
    $region13: #{tpu_custom_call.1} parent=1 // pred_fallthru
      _
    // Predicated region
    $region14: #{tpu_custom_call.1} parent=1 // pred_check
      _
    $region15: #{tpu_custom_call.1} parent=1 // pred_check_branch
      %38 = sbr.rel (0) target = $region17
    $region16: #{tpu_custom_call.1} parent=1 // pred_region
      %40 = dma.done [#allocation3], 2048
    $region17: #{tpu_custom_call.1} parent=1 // pred_fallthru
      _
    // Predicated region
    $region18: #{tpu_custom_call.1} parent=1 // pred_check
      _
    $region19: #{tpu_custom_call.1} parent=1 // pred_check_branch
      %42 = sbr.rel (0) target = $region21
    $region20: #{tpu_custom_call.1} parent=1 // pred_region
      %44 = dma.done [#allocation6], 16
    $region21: #{tpu_custom_call.1} parent=1 // pred_fallthru
      _
    %v45 = vld [vmem:[#allocation2] sm:$0xff]
    %v46 = vld [vmem:[#allocation2 + $0x8] sm:$0xff]
    %v47 = vld [vmem:[#allocation2 + $0x10] sm:$0xff]
    %v48 = vld [vmem:[#allocation2 + $0x18] sm:$0xff]
    %v49 = vld [vmem:[#allocation2 + $0x20] sm:$0xff]
    %v50 = vld [vmem:[#allocation2 + $0x28] sm:$0xff]
    %v51 = vld [vmem:[#allocation2 + $0x30] sm:$0xff]
    %v52 = vld [vmem:[#allocation2 + $0x38] sm:$0xff]
    %v53 = vld [vmem:[#allocation2 + $0x40] sm:$0xff]
    %v54 = vld [vmem:[#allocation2 + $0x48] sm:$0xff]
    %v55 = vld [vmem:[#allocation2 + $0x50] sm:$0xff]
    %v56 = vld [vmem:[#allocation2 + $0x58] sm:$0xff]
    %v57 = vld [vmem:[#allocation2 + $0x60] sm:$0xff]
    %v58 = vld [vmem:[#allocation2 + $0x68] sm:$0xff]
    %v59 = vld [vmem:[#allocation2 + $0x70] sm:$0xff]
    %v60 = vld [vmem:[#allocation2 + $0x78] sm:$0xff]
    %62 = vset.pattern.permute.xlu0 0
    %63 = vperm.xlu0 %62, %v45
    %v64 = vpop.permute.xlu0 %63
    %67 = vset.pattern.permute.xlu0 0
    %68 = vperm.xlu0 %67, %v46
    %v69 = vpop.permute.xlu0 %68
    %72 = vset.pattern.permute.xlu0 0
    %73 = vperm.xlu0 %72, %v47
    %v74 = vpop.permute.xlu0 %73
    %77 = vset.pattern.permute.xlu0 0
    %78 = vperm.xlu0 %77, %v48
    %v79 = vpop.permute.xlu0 %78
    %82 = vset.pattern.permute.xlu0 0
    %83 = vperm.xlu0 %82, %v49
    %v84 = vpop.permute.xlu0 %83
    %87 = vset.pattern.permute.xlu0 0
    %88 = vperm.xlu0 %87, %v50
    %v89 = vpop.permute.xlu0 %88
    %92 = vset.pattern.permute.xlu0 0
    %93 = vperm.xlu0 %92, %v51
    %v94 = vpop.permute.xlu0 %93
    %97 = vset.pattern.permute.xlu0 0
    %98 = vperm.xlu0 %97, %v52
    %v99 = vpop.permute.xlu0 %98
    %102 = vset.pattern.permute.xlu0 0
    %103 = vperm.xlu0 %102, %v53
    %v104 = vpop.permute.xlu0 %103
    %107 = vset.pattern.permute.xlu0 0
    %108 = vperm.xlu0 %107, %v54
    %v109 = vpop.permute.xlu0 %108
    %112 = vset.pattern.permute.xlu0 0
    %113 = vperm.xlu0 %112, %v55
    %v114 = vpop.permute.xlu0 %113
    %117 = vset.pattern.permute.xlu0 0
    %118 = vperm.xlu0 %117, %v56
    %v119 = vpop.permute.xlu0 %118
    %122 = vset.pattern.permute.xlu0 0
    %123 = vperm.xlu0 %122, %v57
    %v124 = vpop.permute.xlu0 %123
    %127 = vset.pattern.permute.xlu0 0
    %128 = vperm.xlu0 %127, %v58
    %v129 = vpop.permute.xlu0 %128
    %132 = vset.pattern.permute.xlu0 0
    %133 = vperm.xlu0 %132, %v59
    %v134 = vpop.permute.xlu0 %133
    %137 = vset.pattern.permute.xlu0 0
    %138 = vperm.xlu0 %137, %v60
    %v139 = vpop.permute.xlu0 %138
    %v141 = vsub.f32 %v45, %v64
    %v142 = vsub.f32 %v46, %v69
    %v143 = vsub.f32 %v47, %v74
    %v144 = vsub.f32 %v48, %v79
    %v145 = vsub.f32 %v49, %v84
    %v146 = vsub.f32 %v50, %v89
    %v147 = vsub.f32 %v51, %v94
    %v148 = vsub.f32 %v52, %v99
    %v149 = vsub.f32 %v53, %v104
    %v150 = vsub.f32 %v54, %v109
    %v151 = vsub.f32 %v55, %v114
    %v152 = vsub.f32 %v56, %v119
    %v153 = vsub.f32 %v57, %v124
    %v154 = vsub.f32 %v58, %v129
    %v155 = vsub.f32 %v59, %v134
    %v156 = vsub.f32 %v60, %v139
    %157 = vmatpush.msra.mxu0 1.0
    %158 = vmatpush.msra.mxu0 1.0
    %159 = vmatpush.msra.mxu0 1.0
    %160 = vmatpush.msra.mxu0 1.0
    %161 = vmatpush.msra.mxu0 1.0
    %162 = vmatpush.msra.mxu0 1.0
    %163 = vmatpush.msra.mxu0 1.0
    %164 = vmatpush.msra.mxu0 1.0
    %165 = vmatpush.msra.mxu0 1.0
    %166 = vmatpush.msra.mxu0 1.0
    %167 = vmatpush.msra.mxu0 1.0
    %168 = vmatpush.msra.mxu0 1.0
    %169 = vmatpush.msra.mxu0 1.0
    %170 = vmatpush.msra.mxu0 1.0
    %171 = vmatpush.msra.mxu0 1.0
    %172 = vmatpush.msra.mxu0 1.0
    %173 = vmatmul.f32.gmra.mxu0 %v141
    %v174 = vpop.f32.mrf.mxu0
    %v175 = vadd.f32 0.0, %v174
    %176 = vmatmul.f32.gmra.mxu0 %v142
    %v177 = vpop.f32.mrf.mxu0
    %v178 = vadd.f32 0.0, %v177
    %179 = vmatmul.f32.gmra.mxu0 %v143
    %v180 = vpop.f32.mrf.mxu0
    %v181 = vadd.f32 0.0, %v180
    %182 = vmatmul.f32.gmra.mxu0 %v144
    %v183 = vpop.f32.mrf.mxu0
    %v184 = vadd.f32 0.0, %v183
    %185 = vmatmul.f32.gmra.mxu0 %v145
    %v186 = vpop.f32.mrf.mxu0
    %v187 = vadd.f32 0.0, %v186
    %188 = vmatmul.f32.gmra.mxu0 %v146
    %v189 = vpop.f32.mrf.mxu0
    %v190 = vadd.f32 0.0, %v189
    %191 = vmatmul.f32.gmra.mxu0 %v147
    %v192 = vpop.f32.mrf.mxu0
    %v193 = vadd.f32 0.0, %v192
    %194 = vmatmul.f32.gmra.mxu0 %v148
    %v195 = vpop.f32.mrf.mxu0
    %v196 = vadd.f32 0.0, %v195
    %197 = vmatmul.f32.gmra.mxu0 %v149
    %v198 = vpop.f32.mrf.mxu0
    %v199 = vadd.f32 0.0, %v198
    %200 = vmatmul.f32.gmra.mxu0 %v150
    %v201 = vpop.f32.mrf.mxu0
    %v202 = vadd.f32 0.0, %v201
    %203 = vmatmul.f32.gmra.mxu0 %v151
    %v204 = vpop.f32.mrf.mxu0
    %v205 = vadd.f32 0.0, %v204
    %206 = vmatmul.f32.gmra.mxu0 %v152
    %v207 = vpop.f32.mrf.mxu0
    %v208 = vadd.f32 0.0, %v207
    %209 = vmatmul.f32.gmra.mxu0 %v153
    %v210 = vpop.f32.mrf.mxu0
    %v211 = vadd.f32 0.0, %v210
    %212 = vmatmul.f32.gmra.mxu0 %v154
    %v213 = vpop.f32.mrf.mxu0
    %v214 = vadd.f32 0.0, %v213
    %215 = vmatmul.f32.gmra.mxu0 %v155
    %v216 = vpop.f32.mrf.mxu0
    %v217 = vadd.f32 0.0, %v216
    %218 = vmatmul.f32.gmra.mxu0 %v156
    %v219 = vpop.f32.mrf.mxu0
    %v220 = vadd.f32 0.0, %v219
    %221 = vdwg.mxu0
    %v222 = vmul.f32 %v141, %v141
    %v223 = vmul.f32 %v142, %v142
    %v224 = vmul.f32 %v143, %v143
    %v225 = vmul.f32 %v144, %v144
    %v226 = vmul.f32 %v145, %v145
    %v227 = vmul.f32 %v146, %v146
    %v228 = vmul.f32 %v147, %v147
    %v229 = vmul.f32 %v148, %v148
    %v230 = vmul.f32 %v149, %v149
    %v231 = vmul.f32 %v150, %v150
    %v232 = vmul.f32 %v151, %v151
    %v233 = vmul.f32 %v152, %v152
    %v234 = vmul.f32 %v153, %v153
    %v235 = vmul.f32 %v154, %v154
    %v236 = vmul.f32 %v155, %v155
    %v237 = vmul.f32 %v156, %v156
    %238 = vmatpush.msra.mxu0 1.0
    %239 = vmatpush.msra.mxu0 1.0
    %240 = vmatpush.msra.mxu0 1.0
    %241 = vmatpush.msra.mxu0 1.0
    %242 = vmatpush.msra.mxu0 1.0
    %243 = vmatpush.msra.mxu0 1.0
    %244 = vmatpush.msra.mxu0 1.0
    %245 = vmatpush.msra.mxu0 1.0
    %246 = vmatpush.msra.mxu0 1.0
    %247 = vmatpush.msra.mxu0 1.0
    %248 = vmatpush.msra.mxu0 1.0
    %249 = vmatpush.msra.mxu0 1.0
    %250 = vmatpush.msra.mxu0 1.0
    %251 = vmatpush.msra.mxu0 1.0
    %252 = vmatpush.msra.mxu0 1.0
    %253 = vmatpush.msra.mxu0 1.0
    %254 = vmatmul.f32.gmra.mxu0 %v222
    %v255 = vpop.f32.mrf.mxu0
    %v256 = vadd.f32 0.0, %v255
    %257 = vmatmul.f32.gmra.mxu0 %v223
    %v258 = vpop.f32.mrf.mxu0
    %v259 = vadd.f32 0.0, %v258
    %260 = vmatmul.f32.gmra.mxu0 %v224
    %v261 = vpop.f32.mrf.mxu0
    %v262 = vadd.f32 0.0, %v261
    %263 = vmatmul.f32.gmra.mxu0 %v225
    %v264 = vpop.f32.mrf.mxu0
    %v265 = vadd.f32 0.0, %v264
    %266 = vmatmul.f32.gmra.mxu0 %v226
    %v267 = vpop.f32.mrf.mxu0
    %v268 = vadd.f32 0.0, %v267
    %269 = vmatmul.f32.gmra.mxu0 %v227
    %v270 = vpop.f32.mrf.mxu0
    %v271 = vadd.f32 0.0, %v270
    %272 = vmatmul.f32.gmra.mxu0 %v228
    %v273 = vpop.f32.mrf.mxu0
    %v274 = vadd.f32 0.0, %v273
    %275 = vmatmul.f32.gmra.mxu0 %v229
    %v276 = vpop.f32.mrf.mxu0
    %v277 = vadd.f32 0.0, %v276
    %278 = vmatmul.f32.gmra.mxu0 %v230
    %v279 = vpop.f32.mrf.mxu0
    %v280 = vadd.f32 0.0, %v279
    %281 = vmatmul.f32.gmra.mxu0 %v231
    %v282 = vpop.f32.mrf.mxu0
    %v283 = vadd.f32 0.0, %v282
    %284 = vmatmul.f32.gmra.mxu0 %v232
    %v285 = vpop.f32.mrf.mxu0
    %v286 = vadd.f32 0.0, %v285
    %287 = vmatmul.f32.gmra.mxu0 %v233
    %v288 = vpop.f32.mrf.mxu0
    %v289 = vadd.f32 0.0, %v288
    %290 = vmatmul.f32.gmra.mxu0 %v234
    %v291 = vpop.f32.mrf.mxu0
    %v292 = vadd.f32 0.0, %v291
    %293 = vmatmul.f32.gmra.mxu0 %v235
    %v294 = vpop.f32.mrf.mxu0
    %v295 = vadd.f32 0.0, %v294
    %296 = vmatmul.f32.gmra.mxu0 %v236
    %v297 = vpop.f32.mrf.mxu0
    %v298 = vadd.f32 0.0, %v297
    %299 = vmatmul.f32.gmra.mxu0 %v237
    %v300 = vpop.f32.mrf.mxu0
    %v301 = vadd.f32 0.0, %v300
    %302 = vdwg.mxu0
    %v303 = vmul.f32 %v175, 0.0078125
    %v304 = vmul.f32 %v178, 0.0078125
    %v305 = vmul.f32 %v181, 0.0078125
    %v306 = vmul.f32 %v184, 0.0078125
    %v307 = vmul.f32 %v187, 0.0078125
    %v308 = vmul.f32 %v190, 0.0078125
    %v309 = vmul.f32 %v193, 0.0078125
    %v310 = vmul.f32 %v196, 0.0078125
    %v311 = vmul.f32 %v199, 0.0078125
    %v312 = vmul.f32 %v202, 0.0078125
    %v313 = vmul.f32 %v205, 0.0078125
    %v314 = vmul.f32 %v208, 0.0078125
    %v315 = vmul.f32 %v211, 0.0078125
    %v316 = vmul.f32 %v214, 0.0078125
    %v317 = vmul.f32 %v217, 0.0078125
    %v318 = vmul.f32 %v220, 0.0078125
    %v319 = vmul.f32 %v256, 0.0078125
    %v320 = vmul.f32 %v259, 0.0078125
    %v321 = vmul.f32 %v262, 0.0078125
    %v322 = vmul.f32 %v265, 0.0078125
    %v323 = vmul.f32 %v268, 0.0078125
    %v324 = vmul.f32 %v271, 0.0078125
    %v325 = vmul.f32 %v274, 0.0078125
    %v326 = vmul.f32 %v277, 0.0078125
    %v327 = vmul.f32 %v280, 0.0078125
    %v328 = vmul.f32 %v283, 0.0078125
    %v329 = vmul.f32 %v286, 0.0078125
    %v330 = vmul.f32 %v289, 0.0078125
    %v331 = vmul.f32 %v292, 0.0078125
    %v332 = vmul.f32 %v295, 0.0078125
    %v333 = vmul.f32 %v298, 0.0078125
    %v334 = vmul.f32 %v301, 0.0078125
    %v335 = vmul.f32 %v303, %v303
    %v336 = vmul.f32 %v304, %v304
    %v337 = vmul.f32 %v305, %v305
    %v338 = vmul.f32 %v306, %v306
    %v339 = vmul.f32 %v307, %v307
    %v340 = vmul.f32 %v308, %v308
    %v341 = vmul.f32 %v309, %v309
    %v342 = vmul.f32 %v310, %v310
    %v343 = vmul.f32 %v311, %v311
    %v344 = vmul.f32 %v312, %v312
    %v345 = vmul.f32 %v313, %v313
    %v346 = vmul.f32 %v314, %v314
    %v347 = vmul.f32 %v315, %v315
    %v348 = vmul.f32 %v316, %v316
    %v349 = vmul.f32 %v317, %v317
    %v350 = vmul.f32 %v318, %v318
    %v351 = vsub.f32 %v319, %v335
    %v352 = vsub.f32 %v320, %v336
    %v353 = vsub.f32 %v321, %v337
    %v354 = vsub.f32 %v322, %v338
    %v355 = vsub.f32 %v323, %v339
    %v356 = vsub.f32 %v324, %v340
    %v357 = vsub.f32 %v325, %v341
    %v358 = vsub.f32 %v326, %v342
    %v359 = vsub.f32 %v327, %v343
    %v360 = vsub.f32 %v328, %v344
    %v361 = vsub.f32 %v329, %v345
    %v362 = vsub.f32 %v330, %v346
    %v363 = vsub.f32 %v331, %v347
    %v364 = vsub.f32 %v332, %v348
    %v365 = vsub.f32 %v333, %v349
    %v366 = vsub.f32 %v334, %v350
    %v367 = vmax.f32 %v351, 0.0
    %v368 = vmax.f32 %v352, 0.0
    %v369 = vmax.f32 %v353, 0.0
    %v370 = vmax.f32 %v354, 0.0
    %v371 = vmax.f32 %v355, 0.0
    %v372 = vmax.f32 %v356, 0.0
    %v373 = vmax.f32 %v357, 0.0
    %v374 = vmax.f32 %v358, 0.0
    %v375 = vmax.f32 %v359, 0.0
    %v376 = vmax.f32 %v360, 0.0
    %v377 = vmax.f32 %v361, 0.0
    %v378 = vmax.f32 %v362, 0.0
    %v379 = vmax.f32 %v363, 0.0
    %v380 = vmax.f32 %v364, 0.0
    %v381 = vmax.f32 %v365, 0.0
    %v382 = vmax.f32 %v366, 0.0
    %v383 = vadd.f32 %v367, 1e-06
    %v384 = vadd.f32 %v368, 1e-06
    %v385 = vadd.f32 %v369, 1e-06
    %v386 = vadd.f32 %v370, 1e-06
    %v387 = vadd.f32 %v371, 1e-06
    %v388 = vadd.f32 %v372, 1e-06
    %v389 = vadd.f32 %v373, 1e-06
    %v390 = vadd.f32 %v374, 1e-06
    %v391 = vadd.f32 %v375, 1e-06
    %v392 = vadd.f32 %v376, 1e-06
    %v393 = vadd.f32 %v377, 1e-06
    %v394 = vadd.f32 %v378, 1e-06
    %v395 = vadd.f32 %v379, 1e-06
    %v396 = vadd.f32 %v380, 1e-06
    %v397 = vadd.f32 %v381, 1e-06
    %v398 = vadd.f32 %v382, 1e-06
    %v399 = vrsqrt.pop %v383
    %v400 = vmul.f32 %v399, %v383
    %v401 = vmul.f32 %v400, %v399
    %v402 = vmul.f32 0.5, %v401
    %v403 = vsub.f32 1.5, %v402
    %v404 = vmul.f32 %v399, %v403
    %vm405 = vweird.f32 %v383
    %vm406 = vweird.f32 %v399
    %vm407 = vmor %vm405, %vm406
    %v408 = vsel %vm407, %v399, %v404
    %v409 = vrsqrt.pop %v384
    %v410 = vmul.f32 %v409, %v384
    %v411 = vmul.f32 %v410, %v409
    %v412 = vmul.f32 0.5, %v411
    %v413 = vsub.f32 1.5, %v412
    %v414 = vmul.f32 %v409, %v413
    %vm415 = vweird.f32 %v384
    %vm416 = vweird.f32 %v409
    %vm417 = vmor %vm415, %vm416
    %v418 = vsel %vm417, %v409, %v414
    %v419 = vrsqrt.pop %v385
    %v420 = vmul.f32 %v419, %v385
    %v421 = vmul.f32 %v420, %v419
    %v422 = vmul.f32 0.5, %v421
    %v423 = vsub.f32 1.5, %v422
    %v424 = vmul.f32 %v419, %v423
    %vm425 = vweird.f32 %v385
    %vm426 = vweird.f32 %v419
    %vm427 = vmor %vm425, %vm426
    %v428 = vsel %vm427, %v419, %v424
    %v429 = vrsqrt.pop %v386
    %v430 = vmul.f32 %v429, %v386
    %v431 = vmul.f32 %v430, %v429
    %v432 = vmul.f32 0.5, %v431
    %v433 = vsub.f32 1.5, %v432
    %v434 = vmul.f32 %v429, %v433
    %vm435 = vweird.f32 %v386
    %vm436 = vweird.f32 %v429
    %vm437 = vmor %vm435, %vm436
    %v438 = vsel %vm437, %v429, %v434
    %v439 = vrsqrt.pop %v387
    %v440 = vmul.f32 %v439, %v387
    %v441 = vmul.f32 %v440, %v439
    %v442 = vmul.f32 0.5, %v441
    %v443 = vsub.f32 1.5, %v442
    %v444 = vmul.f32 %v439, %v443
    %vm445 = vweird.f32 %v387
    %vm446 = vweird.f32 %v439
    %vm447 = vmor %vm445, %vm446
    %v448 = vsel %vm447, %v439, %v444
    %v449 = vrsqrt.pop %v388
    %v450 = vmul.f32 %v449, %v388
    %v451 = vmul.f32 %v450, %v449
    %v452 = vmul.f32 0.5, %v451
    %v453 = vsub.f32 1.5, %v452
    %v454 = vmul.f32 %v449, %v453
    %vm455 = vweird.f32 %v388
    %vm456 = vweird.f32 %v449
    %vm457 = vmor %vm455, %vm456
    %v458 = vsel %vm457, %v449, %v454
    %v459 = vrsqrt.pop %v389
    %v460 = vmul.f32 %v459, %v389
    %v461 = vmul.f32 %v460, %v459
    %v462 = vmul.f32 0.5, %v461
    %v463 = vsub.f32 1.5, %v462
    %v464 = vmul.f32 %v459, %v463
    %vm465 = vweird.f32 %v389
    %vm466 = vweird.f32 %v459
    %vm467 = vmor %vm465, %vm466
    %v468 = vsel %vm467, %v459, %v464
    %v469 = vrsqrt.pop %v390
    %v470 = vmul.f32 %v469, %v390
    %v471 = vmul.f32 %v470, %v469
    %v472 = vmul.f32 0.5, %v471
    %v473 = vsub.f32 1.5, %v472
    %v474 = vmul.f32 %v469, %v473
    %vm475 = vweird.f32 %v390
    %vm476 = vweird.f32 %v469
    %vm477 = vmor %vm475, %vm476
    %v478 = vsel %vm477, %v469, %v474
    %v479 = vrsqrt.pop %v391
    %v480 = vmul.f32 %v479, %v391
    %v481 = vmul.f32 %v480, %v479
    %v482 = vmul.f32 0.5, %v481
    %v483 = vsub.f32 1.5, %v482
    %v484 = vmul.f32 %v479, %v483
    %vm485 = vweird.f32 %v391
    %vm486 = vweird.f32 %v479
    %vm487 = vmor %vm485, %vm486
    %v488 = vsel %vm487, %v479, %v484
    %v489 = vrsqrt.pop %v392
    %v490 = vmul.f32 %v489, %v392
    %v491 = vmul.f32 %v490, %v489
    %v492 = vmul.f32 0.5, %v491
    %v493 = vsub.f32 1.5, %v492
    %v494 = vmul.f32 %v489, %v493
    %vm495 = vweird.f32 %v392
    %vm496 = vweird.f32 %v489
    %vm497 = vmor %vm495, %vm496
    %v498 = vsel %vm497, %v489, %v494
    %v499 = vrsqrt.pop %v393
    %v500 = vmul.f32 %v499, %v393
    %v501 = vmul.f32 %v500, %v499
    %v502 = vmul.f32 0.5, %v501
    %v503 = vsub.f32 1.5, %v502
    %v504 = vmul.f32 %v499, %v503
    %vm505 = vweird.f32 %v393
    %vm506 = vweird.f32 %v499
    %vm507 = vmor %vm505, %vm506
    %v508 = vsel %vm507, %v499, %v504
    %v509 = vrsqrt.pop %v394
    %v510 = vmul.f32 %v509, %v394
    %v511 = vmul.f32 %v510, %v509
    %v512 = vmul.f32 0.5, %v511
    %v513 = vsub.f32 1.5, %v512
    %v514 = vmul.f32 %v509, %v513
    %vm515 = vweird.f32 %v394
    %vm516 = vweird.f32 %v509
    %vm517 = vmor %vm515, %vm516
    %v518 = vsel %vm517, %v509, %v514
    %v519 = vrsqrt.pop %v395
    %v520 = vmul.f32 %v519, %v395
    %v521 = vmul.f32 %v520, %v519
    %v522 = vmul.f32 0.5, %v521
    %v523 = vsub.f32 1.5, %v522
    %v524 = vmul.f32 %v519, %v523
    %vm525 = vweird.f32 %v395
    %vm526 = vweird.f32 %v519
    %vm527 = vmor %vm525, %vm526
    %v528 = vsel %vm527, %v519, %v524
    %v529 = vrsqrt.pop %v396
    %v530 = vmul.f32 %v529, %v396
    %v531 = vmul.f32 %v530, %v529
    %v532 = vmul.f32 0.5, %v531
    %v533 = vsub.f32 1.5, %v532
    %v534 = vmul.f32 %v529, %v533
    %vm535 = vweird.f32 %v396
    %vm536 = vweird.f32 %v529
    %vm537 = vmor %vm535, %vm536
    %v538 = vsel %vm537, %v529, %v534
    %v539 = vrsqrt.pop %v397
    %v540 = vmul.f32 %v539, %v397
    %v541 = vmul.f32 %v540, %v539
    %v542 = vmul.f32 0.5, %v541
    %v543 = vsub.f32 1.5, %v542
    %v544 = vmul.f32 %v539, %v543
    %vm545 = vweird.f32 %v397
    %vm546 = vweird.f32 %v539
    %vm547 = vmor %vm545, %vm546
    %v548 = vsel %vm547, %v539, %v544
    %v549 = vrsqrt.pop %v398
    %v550 = vmul.f32 %v549, %v398
    %v551 = vmul.f32 %v550, %v549
    %v552 = vmul.f32 0.5, %v551
    %v553 = vsub.f32 1.5, %v552
    %v554 = vmul.f32 %v549, %v553
    %vm555 = vweird.f32 %v398
    %vm556 = vweird.f32 %v549
    %vm557 = vmor %vm555, %vm556
    %v558 = vsel %vm557, %v549, %v554
    %560 = vset.pattern.permute.xlu0 0
    %561 = vperm.xlu0 %560, %v303
    %v562 = vpop.permute.xlu0 %561
    %565 = vset.pattern.permute.xlu0 0
    %566 = vperm.xlu0 %565, %v304
    %v567 = vpop.permute.xlu0 %566
    %570 = vset.pattern.permute.xlu0 0
    %571 = vperm.xlu0 %570, %v305
    %v572 = vpop.permute.xlu0 %571
    %575 = vset.pattern.permute.xlu0 0
    %576 = vperm.xlu0 %575, %v306
    %v577 = vpop.permute.xlu0 %576
    %580 = vset.pattern.permute.xlu0 0
    %581 = vperm.xlu0 %580, %v307
    %v582 = vpop.permute.xlu0 %581
    %585 = vset.pattern.permute.xlu0 0
    %586 = vperm.xlu0 %585, %v308
    %v587 = vpop.permute.xlu0 %586
    %590 = vset.pattern.permute.xlu0 0
    %591 = vperm.xlu0 %590, %v309
    %v592 = vpop.permute.xlu0 %591
    %595 = vset.pattern.permute.xlu0 0
    %596 = vperm.xlu0 %595, %v310
    %v597 = vpop.permute.xlu0 %596
    %600 = vset.pattern.permute.xlu0 0
    %601 = vperm.xlu0 %600, %v311
    %v602 = vpop.permute.xlu0 %601
    %605 = vset.pattern.permute.xlu0 0
    %606 = vperm.xlu0 %605, %v312
    %v607 = vpop.permute.xlu0 %606
    %610 = vset.pattern.permute.xlu0 0
    %611 = vperm.xlu0 %610, %v313
    %v612 = vpop.permute.xlu0 %611
    %615 = vset.pattern.permute.xlu0 0
    %616 = vperm.xlu0 %615, %v314
    %v617 = vpop.permute.xlu0 %616
    %620 = vset.pattern.permute.xlu0 0
    %621 = vperm.xlu0 %620, %v315
    %v622 = vpop.permute.xlu0 %621
    %625 = vset.pattern.permute.xlu0 0
    %626 = vperm.xlu0 %625, %v316
    %v627 = vpop.permute.xlu0 %626
    %630 = vset.pattern.permute.xlu0 0
    %631 = vperm.xlu0 %630, %v317
    %v632 = vpop.permute.xlu0 %631
    %635 = vset.pattern.permute.xlu0 0
    %636 = vperm.xlu0 %635, %v318
    %v637 = vpop.permute.xlu0 %636
    %v639 = vsub.f32 %v141, %v562
    %v640 = vsub.f32 %v142, %v567
    %v641 = vsub.f32 %v143, %v572
    %v642 = vsub.f32 %v144, %v577
    %v643 = vsub.f32 %v145, %v582
    %v644 = vsub.f32 %v146, %v587
    %v645 = vsub.f32 %v147, %v592
    %v646 = vsub.f32 %v148, %v597
    %v647 = vsub.f32 %v149, %v602
    %v648 = vsub.f32 %v150, %v607
    %v649 = vsub.f32 %v151, %v612
    %v650 = vsub.f32 %v152, %v617
    %v651 = vsub.f32 %v153, %v622
    %v652 = vsub.f32 %v154, %v627
    %v653 = vsub.f32 %v155, %v632
    %v654 = vsub.f32 %v156, %v637
    %656 = vset.pattern.permute.xlu0 0
    %657 = vperm.xlu0 %656, %v408
    %v658 = vpop.permute.xlu0 %657
    %661 = vset.pattern.permute.xlu0 0
    %662 = vperm.xlu0 %661, %v418
    %v663 = vpop.permute.xlu0 %662
    %666 = vset.pattern.permute.xlu0 0
    %667 = vperm.xlu0 %666, %v428
    %v668 = vpop.permute.xlu0 %667
    %671 = vset.pattern.permute.xlu0 0
    %672 = vperm.xlu0 %671, %v438
    %v673 = vpop.permute.xlu0 %672
    %676 = vset.pattern.permute.xlu0 0
    %677 = vperm.xlu0 %676, %v448
    %v678 = vpop.permute.xlu0 %677
    %681 = vset.pattern.permute.xlu0 0
    %682 = vperm.xlu0 %681, %v458
    %v683 = vpop.permute.xlu0 %682
    %686 = vset.pattern.permute.xlu0 0
    %687 = vperm.xlu0 %686, %v468
    %v688 = vpop.permute.xlu0 %687
    %691 = vset.pattern.permute.xlu0 0
    %692 = vperm.xlu0 %691, %v478
    %v693 = vpop.permute.xlu0 %692
    %696 = vset.pattern.permute.xlu0 0
    %697 = vperm.xlu0 %696, %v488
    %v698 = vpop.permute.xlu0 %697
    %701 = vset.pattern.permute.xlu0 0
    %702 = vperm.xlu0 %701, %v498
    %v703 = vpop.permute.xlu0 %702
    %706 = vset.pattern.permute.xlu0 0
    %707 = vperm.xlu0 %706, %v508
    %v708 = vpop.permute.xlu0 %707
    %711 = vset.pattern.permute.xlu0 0
    %712 = vperm.xlu0 %711, %v518
    %v713 = vpop.permute.xlu0 %712
    %716 = vset.pattern.permute.xlu0 0
    %717 = vperm.xlu0 %716, %v528
    %v718 = vpop.permute.xlu0 %717
    %721 = vset.pattern.permute.xlu0 0
    %722 = vperm.xlu0 %721, %v538
    %v723 = vpop.permute.xlu0 %722
    %726 = vset.pattern.permute.xlu0 0
    %727 = vperm.xlu0 %726, %v548
    %v728 = vpop.permute.xlu0 %727
    %731 = vset.pattern.permute.xlu0 0
    %732 = vperm.xlu0 %731, %v558
    %v733 = vpop.permute.xlu0 %732
    %v735 = vmul.f32 %v639, %v658
    %v736 = vmul.f32 %v640, %v663
    %v737 = vmul.f32 %v641, %v668
    %v738 = vmul.f32 %v642, %v673
    %v739 = vmul.f32 %v643, %v678
    %v740 = vmul.f32 %v644, %v683
    %v741 = vmul.f32 %v645, %v688
    %v742 = vmul.f32 %v646, %v693
    %v743 = vmul.f32 %v647, %v698
    %v744 = vmul.f32 %v648, %v703
    %v745 = vmul.f32 %v649, %v708
    %v746 = vmul.f32 %v650, %v713
    %v747 = vmul.f32 %v651, %v718
    %v748 = vmul.f32 %v652, %v723
    %v749 = vmul.f32 %v653, %v728
    %v750 = vmul.f32 %v654, %v733
    %v751 = vld [vmem:[#allocation5] sm:$0x1]
    %v753 = vperm.slane %v751, 0
    %v755 = vmul.f32 %v735, %v753
    %v756 = vmul.f32 %v736, %v753
    %v757 = vmul.f32 %v737, %v753
    %v758 = vmul.f32 %v738, %v753
    %v759 = vmul.f32 %v739, %v753
    %v760 = vmul.f32 %v740, %v753
    %v761 = vmul.f32 %v741, %v753
    %v762 = vmul.f32 %v742, %v753
    %v763 = vmul.f32 %v743, %v753
    %v764 = vmul.f32 %v744, %v753
    %v765 = vmul.f32 %v745, %v753
    %v766 = vmul.f32 %v746, %v753
    %v767 = vmul.f32 %v747, %v753
    %v768 = vmul.f32 %v748, %v753
    %v769 = vmul.f32 %v749, %v753
    %v770 = vmul.f32 %v750, %v753
    %v771 = vld [vmem:[%s2] sm:$0x1]
    %v773 = vperm.slane %v771, 0
    %v775 = vadd.f32 %v755, %v773
    %v776 = vadd.f32 %v756, %v773
    %v777 = vadd.f32 %v757, %v773
    %v778 = vadd.f32 %v758, %v773
    %v779 = vadd.f32 %v759, %v773
    %v780 = vadd.f32 %v760, %v773
    %v781 = vadd.f32 %v761, %v773
    %v782 = vadd.f32 %v762, %v773
    %v783 = vadd.f32 %v763, %v773
    %v784 = vadd.f32 %v764, %v773
    %v785 = vadd.f32 %v765, %v773
    %v786 = vadd.f32 %v766, %v773
    %v787 = vadd.f32 %v767, %v773
    %v788 = vadd.f32 %v768, %v773
    %v789 = vadd.f32 %v769, %v773
    %v790 = vadd.f32 %v770, %v773
    %791 = vst [vmem:[#allocation7] sm:$0xff] %v775
    %792 = vst [vmem:[#allocation7 + $0x8] sm:$0xff] %v776
    %793 = vst [vmem:[#allocation7 + $0x10] sm:$0xff] %v777
    %794 = vst [vmem:[#allocation7 + $0x18] sm:$0xff] %v778
    %795 = vst [vmem:[#allocation7 + $0x20] sm:$0xff] %v779
    %796 = vst [vmem:[#allocation7 + $0x28] sm:$0xff] %v780
    %797 = vst [vmem:[#allocation7 + $0x30] sm:$0xff] %v781
    %798 = vst [vmem:[#allocation7 + $0x38] sm:$0xff] %v782
    %799 = vst [vmem:[#allocation7 + $0x40] sm:$0xff] %v783
    %800 = vst [vmem:[#allocation7 + $0x48] sm:$0xff] %v784
    %801 = vst [vmem:[#allocation7 + $0x50] sm:$0xff] %v785
    %802 = vst [vmem:[#allocation7 + $0x58] sm:$0xff] %v786
    %803 = vst [vmem:[#allocation7 + $0x60] sm:$0xff] %v787
    %804 = vst [vmem:[#allocation7 + $0x68] sm:$0xff] %v788
    %805 = vst [vmem:[#allocation7 + $0x70] sm:$0xff] %v789
    %806 = vst [vmem:[#allocation7 + $0x78] sm:$0xff] %v790
    // Predicated region
    $region22: #{tpu_custom_call.1} parent=1 // pred_check
      _
    $region23: #{tpu_custom_call.1} parent=1 // pred_check_branch
      %808 = sbr.rel (0) target = $region25
    $region24: #{tpu_custom_call.1} parent=1 // pred_region
      %810 = vsyncadd [#allocation4], 0
      %s811 = sshll.u32 [#allocation7], 4
      %s812 = int_to_ptr.vmem [resolvable:$true] %s811
      %s813 = sshll.u32 %s3, 4
      %s814 = int_to_ptr.hbm [resolvable:$true] %s813
      %819 = dma.vmem_to_hbm [thread:$0]  %s812, 2048, %s814, [#allocation4], 128, 128, 8
    $region25: #{tpu_custom_call.1} parent=1 // pred_fallthru
      _
    // Predicated region
    $region26: #{tpu_custom_call.1} parent=1 // pred_check
      _
    $region27: #{tpu_custom_call.1} parent=1 // pred_check_branch
      %821 = sbr.rel (0) target = $region29
    $region28: #{tpu_custom_call.1} parent=1 // pred_region
      %823 = dma.done [#allocation4], 2048
    $region29: #{tpu_custom_call.1} parent=1 // pred_fallthru
      _
    %824 = vsyncpa [#allocation3], 1
    %825 = vsyncpa [#allocation6], 1
    %826 = vsyncpa [#allocation4], 1

</llo_original>
